<compile_context>
chip_gen: v7x
topology: tpu7x:2x2x1
jax: 0.10.0
libtpu: 0.0.40
codegen_flags: <defaults>
</compile_context>

<pallas_src>
import functools

import jax
import jax.numpy as jnp
from jax import lax
from jax.experimental import pallas as pl
from jax.experimental.pallas import tpu as pltpu

LANES = 128
SUBLANES = 8
ACC_ROWS = 32                 # resident accumulator rows per split (4 f32 vregs)
CHUNK_ROWS = 512              # rows fused per inner-loop step (sub->sq->acc in vregs)
TARGET_BLOCK_BYTES = 4 << 20  # 4 MiB per input per grid step
NUM_SPLITS = 2                # leading "parallel" axis (one block per TC on v7x)
MIN_BLOCKS_FOR_SPLIT = 8
VMEM_LIMIT_BYTES = 40 << 20   # 2 inputs x 2 buffers x 4 MiB = 16 MiB + headroom;
                              # above scoped defaults, below physical on all gens.


def _round_up(x: int, m: int) -> int:
    return ((x + m - 1) // m) * m


def _mse_partial_kernel(xr_ref, x_ref, out_ref, *, block_rows, chunk_rows,
                        acc_rows, blocks_per_split, blocks_total, total_rows,
                        needs_mask):
    c = pl.program_id(0)   # parallel split (TensorCore on v7x)
    i = pl.program_id(1)   # reduction ("arbitrary") axis

    # Output block for this split is resident across the reduction axis.
    @pl.when(i == 0)
    def _():
        out_ref[...] = jnp.zeros_like(out_ref)

    blk = c * blocks_per_split + i
    n_chunks = block_rows // chunk_rows
    unroll = True if n_chunks <= 16 else 8

    def accumulate(masked):
        row0 = blk * block_rows

        def body(j, acc):
            r = pl.multiple_of(j * chunk_rows, chunk_rows)
            a = xr_ref[pl.ds(r, chunk_rows), :].astype(jnp.float32)
            b = x_ref[pl.ds(r, chunk_rows), :].astype(jnp.float32)
            d = a - b
            if masked:
                # Only the single partial edge block takes this path at
                # runtime; zero invalid rows BEFORE squaring (select, not
                # arithmetic) so stale VMEM / NaNs never reach the sum.
                rid = lax.broadcasted_iota(jnp.int32, d.shape, 0) + (row0 + r)
                d = jnp.where(rid < total_rows, d, jnp.float32(0.0))
            sq = d * d
            # Pure-VPU sublane-group accumulation into acc_rows x 128;
            # no XLU cross-lane reduce in the hot loop.
            return acc + sq.reshape(-1, acc_rows, LANES).sum(axis=0)

        acc = lax.fori_loop(0, n_chunks, body,
                            jnp.zeros((acc_rows, LANES), jnp.float32),
                            unroll=unroll)
        out_ref[...] += acc

    if needs_mask:
        is_edge = blk == blocks_total - 1

        @pl.when(is_edge)
        def _():
            accumulate(masked=True)

        @pl.when(jnp.logical_not(is_edge))
        def _():
            accumulate(masked=False)
    else:
        accumulate(masked=False)


def l2_loss(x_recon: jax.Array, x: jax.Array, mean=None, log_var=None):
    """Pallas equivalent of L2.forward: returns (MSE(x_recon, x), None, None)."""
    assert x_recon.shape == x.shape
    n = x.size

    # Keep kernel dtypes to ones TPU handles natively; anything else -> f32.
    if x_recon.dtype != x.dtype or x.dtype not in (jnp.float32, jnp.bfloat16,
                                                   jnp.float16):
        x_recon = x_recon.astype(jnp.float32)
        x = x.astype(jnp.float32)

    # Trivially small inputs: a Pallas launch is pure overhead; let XLA fuse.
    if n < SUBLANES * LANES:
        d = x_recon.astype(jnp.float32) - x.astype(jnp.float32)
        return jnp.mean(d * d), None, None

    flat_r = x_recon.reshape(-1)
    flat_x = x.reshape(-1)

    rem = n % LANES
    tail_sq = None
    if rem:
        # Rare odd sizes: reduce the <128-element tail in plain JAX instead of
        # padding (a full jnp.pad would re-copy both arrays through HBM).
        tr = lax.slice(flat_r, (n - rem,), (n,)).astype(jnp.float32)
        tx = lax.slice(flat_x, (n - rem,), (n,)).astype(jnp.float32)
        td = tr - tx
        tail_sq = jnp.sum(td * td)
        flat_r = lax.slice(flat_r, (0,), (n - rem,))
        flat_x = lax.slice(flat_x, (0,), (n - rem,))

    rows = (n - rem) // LANES
    xr2d = flat_r.reshape(rows, LANES)   # lane-dense view; free when rem == 0
    x2d = flat_x.reshape(rows, LANES)

    itemsize = jnp.dtype(x2d.dtype).itemsize
    # 4 MiB per input per step: 8192 rows (f32) / 16384 rows (bf16/f16).
    target_rows = max(CHUNK_ROWS, TARGET_BLOCK_BYTES // (LANES * itemsize))

    if rows <= CHUNK_ROWS:
        block_rows = _round_up(rows, SUBLANES)
    else:
        block_rows = min(target_rows, _round_up(rows, CHUNK_ROWS))

    blocks_total = pl.cdiv(rows, block_rows)

    # v7x load balance: make the block count even (one resident accumulator
    # per TensorCore) without ever issuing a duplicated/clamped block.
    if blocks_total >= MIN_BLOCKS_FOR_SPLIT and blocks_total % NUM_SPLITS != 0:
        block_rows = _round_up(pl.cdiv(rows, blocks_total + 1), CHUNK_ROWS)
        blocks_total = pl.cdiv(rows, block_rows)

    if blocks_total >= MIN_BLOCKS_FOR_SPLIT and blocks_total % NUM_SPLITS == 0:
        splits = NUM_SPLITS
    else:
        splits = 1
    blocks_per_split = blocks_total // splits

    acc_rows = ACC_ROWS if block_rows % ACC_ROWS == 0 else SUBLANES
    chunk_rows = min(block_rows, CHUNK_ROWS)
    needs_mask = (blocks_total * block_rows) != rows

    kernel = functools.partial(
        _mse_partial_kernel,
        block_rows=block_rows,
        chunk_rows=chunk_rows,
        acc_rows=acc_rows,
        blocks_per_split=blocks_per_split,
        blocks_total=blocks_total,
        total_rows=rows,
        needs_mask=needs_mask,
    )

    def in_map(c, i):
        return (c * blocks_per_split + i, 0)

    partials = pl.pallas_call(
        kernel,
        out_shape=jax.ShapeDtypeStruct((splits * acc_rows, LANES), jnp.float32),
        grid_spec=pltpu.PrefetchScalarGridSpec(
            num_scalar_prefetch=0,
            grid=(splits, blocks_per_split),
            in_specs=[
                pl.BlockSpec((block_rows, LANES), in_map),
                pl.BlockSpec((block_rows, LANES), in_map),
            ],
            out_specs=pl.BlockSpec((acc_rows, LANES), lambda c, i: (c, 0)),
        ),
        compiler_params=pltpu.CompilerParams(
            dimension_semantics=("parallel", "arbitrary"),
            vmem_limit_bytes=VMEM_LIMIT_BYTES,
        ),
        cost_estimate=pl.CostEstimate(
            flops=3 * rows * LANES,
            transcendentals=0,
            bytes_accessed=2 * rows * LANES * itemsize
            + splits * acc_rows * LANES * 4,
        ),
    )(xr2d, x2d)

    # Tiny cross-lane reduction + mean normalization in plain JAX.
    total = jnp.sum(partials)
    if tail_sq is not None:
        total = total + tail_sq
    recon_loss = total / jnp.float32(n)
    return recon_loss, None, None


if __name__ == "__main__":
    key = jax.random.PRNGKey(0)
    k1, k2, k3, k4 = jax.random.split(key, 4)

    # Shapes consistent with a VAE-style forward: NCHW images.
    x_recon = jax.random.normal(k1, (2, 4, 16, 16), dtype=jnp.float32)
    x = jax.random.normal(k2, (2, 4, 16, 16), dtype=jnp.float32)
    # mean / log_var are unused by L2.forward, but mirror the signature.
    mean = jax.random.normal(k3, (2, 32), dtype=jnp.float32)
    log_var = jax.random.normal(k4, (2, 32), dtype=jnp.float32)

    recon_loss, a, b = l2_loss(x_recon, x, mean, log_var)
    recon_loss = jax.block_until_ready(recon_loss)

    # Reference check in plain JAX (MSELoss with default 'mean' reduction).
    ref = jnp.mean((x_recon - x) ** 2)
    assert a is None and b is None
    assert jnp.allclose(recon_loss, ref, rtol=1e-6, atol=1e-6), (recon_loss, ref)

    print("KERNEL_OK")
</pallas_src>

<mosaic_0001>
module attributes {stable_mosaic.version = 11 : i64} {
  func.func @_mse_partial_kernel(%arg0: i32, %arg1: i32, %arg2: memref<16x128xf32, #tpu.memory_space<vmem>>, %arg3: memref<16x128xf32, #tpu.memory_space<vmem>>, %arg4: memref<8x128xf32, #tpu.memory_space<vmem>>) attributes {dimension_semantics = [#tpu.dimension_semantics<parallel>, #tpu.dimension_semantics<arbitrary>], iteration_bounds = array<i64: 1, 1>, scalar_prefetch = 0 : i64, scratch_operands = 0 : i64, tpu.core_type = #tpu.core_type<tc>, window_params = [{transform_indices = @transform_0, window_bounds = array<i64: 16, 128>}, {transform_indices = @transform_1, window_bounds = array<i64: 16, 128>}, {transform_indices = @transform_2, window_bounds = array<i64: 8, 128>}]} {
    %c0_i32 = arith.constant 0 : i32
    %0 = arith.cmpi eq, %arg1, %c0_i32 : i32
    %1 = arith.extui %0 : i1 to i32
    %c0_i32_0 = arith.constant 0 : i32
    %2 = arith.cmpi ne, %1, %c0_i32_0 : i32
    scf.if %2 {
      %cst_8 = arith.constant 0.000000e+00 : f32
      %18 = vector.broadcast %cst_8 : f32 to vector<8x128xf32>
      %c0_9 = arith.constant 0 : index
      %c0_10 = arith.constant 0 : index
      %19 = vector.load %arg4[%c0_9, %c0_10] : memref<8x128xf32, #tpu.memory_space<vmem>>, vector<8x128xf32>
      tpu.vector_store %arg4[%c0_9, %c0_10], %18 {strides = array<i32>} : memref<8x128xf32, #tpu.memory_space<vmem>>, vector<8x128xf32>,
    } else {
    }
    %cst = arith.constant 0.000000e+00 : f32
    %3 = vector.broadcast %cst : f32 to vector<8x128xf32>
    %c0_i32_1 = arith.constant 0 : i32
    %c16_i32 = arith.constant 16 : i32
    %4 = arith.muli %c0_i32_1, %c16_i32 : i32
    %5 = tpu.assume_multiple %4, 16 : i32
    %6 = arith.index_cast %5 : i32 to index
    %c0 = arith.constant 0 : index
    %7 = vector.load %arg2[%6, %c0] : memref<16x128xf32, #tpu.memory_space<vmem>>, vector<16x128xf32>
    %8 = arith.index_cast %5 : i32 to index
    %c0_2 = arith.constant 0 : index
    %9 = vector.load %arg3[%8, %c0_2] : memref<16x128xf32, #tpu.memory_space<vmem>>, vector<16x128xf32>
    %10 = arith.subf %7, %9 : vector<16x128xf32>
    %11 = arith.mulf %10, %10 : vector<16x128xf32>
    %12 = vector.shape_cast %11 : vector<16x128xf32> to vector<2x8x128xf32>
    %cst_3 = arith.constant dense<0.000000e+00> : vector<8x128xf32>
    %13 = vector.multi_reduction <add>, %12, %cst_3 [0] : vector<2x8x128xf32> to vector<8x128xf32>
    %14 = arith.addf %3, %13 : vector<8x128xf32>
    %c1_i32 = arith.constant 1 : i32
    %c0_4 = arith.constant 0 : index
    %c0_5 = arith.constant 0 : index
    %15 = vector.load %arg4[%c0_4, %c0_5] : memref<8x128xf32, #tpu.memory_space<vmem>>, vector<8x128xf32>
    %16 = arith.addf %15, %14 : vector<8x128xf32>
    %c0_6 = arith.constant 0 : index
    %c0_7 = arith.constant 0 : index
    %17 = vector.load %arg4[%c0_6, %c0_7] : memref<8x128xf32, #tpu.memory_space<vmem>>, vector<8x128xf32>
    tpu.vector_store %arg4[%c0_6, %c0_7], %16 {strides = array<i32>} : memref<8x128xf32, #tpu.memory_space<vmem>>, vector<8x128xf32>,
    return
  }
  func.func @transform_0(%arg0: i32, %arg1: i32) -> (i32, i32) {
    %c1_i32 = arith.constant 1 : i32
    %0 = arith.muli %arg0, %c1_i32 : i32
    %1 = arith.addi %0, %arg1 : i32
    %c0_i32 = arith.constant 0 : i32
    %c0_i32_0 = arith.constant 0 : i32
    return %1, %c0_i32 : i32, i32
  }
  func.func @transform_1(%arg0: i32, %arg1: i32) -> (i32, i32) {
    %c1_i32 = arith.constant 1 : i32
    %0 = arith.muli %arg0, %c1_i32 : i32
    %1 = arith.addi %0, %arg1 : i32
    %c0_i32 = arith.constant 0 : i32
    %c0_i32_0 = arith.constant 0 : i32
    return %1, %c0_i32 : i32, i32
  }
  func.func @transform_2(%arg0: i32, %arg1: i32) -> (i32, i32) {
    %c0_i32 = arith.constant 0 : i32
    %c0_i32_0 = arith.constant 0 : i32
    return %arg0, %c0_i32 : i32, i32
  }
}

</mosaic_0001>

<llo_original>
// kernel: tpu_custom_call.1
$region0: #{tpu_custom_call.1}
  #allocation0 [shape = 'u32[]', space=smem, size = 0x4, offset = 0x4, fixed_abs, tag = 'smem constant byte address 0x4 - core index']
  #allocation1 [shape = 'u32[144,128]{1,0:T(1,128)}', space=vmem, size = 0x12000, scoped, tag = 'internal scratch']
  %s0 = inlined_call_operand.hbm [shape: f32[16,128], index: 0, kind: input, shape index: {}]
  %s1 = inlined_call_operand.hbm [shape: f32[16,128], index: 1, kind: input, shape index: {}]
  %s2 = inlined_call_operand.hbm [shape: f32[8,128], index: 2, kind: output, shape index: {}]
  %s3 = sld [smem:[#allocation0]]
  $region30: #{tpu_custom_call.1} parent=0
    _
  %s5 = ssub.s32 1, %s3
  %s6 = scalar_select 0, %s5, %s3
  $region1: #{tpu_custom_call.1} parent=0
    #allocation2 [shape = 'u8[8192]{0}', space=vmem, size = 0x2000, scoped, tag = 'input window, operand 0, single buffered']
    #allocation3 [shape = 's32[1]{0}', space=sflag, size = 0x4, scoped, tag = 'scoped memory for tpu_custom_call.1']
    #allocation4 [shape = 's32[1]{0}', space=sflag, size = 0x4, scoped, tag = 'scoped memory for tpu_custom_call.1']
    #allocation5 [shape = 'u8[8192]{0}', space=vmem, size = 0x2000, scoped, tag = 'input window, operand 1, single buffered']
    #allocation6 [shape = 's32[1]{0}', space=sflag, size = 0x4, scoped, tag = 'scoped memory for tpu_custom_call.1']
    #allocation7 [shape = 'u8[4096]{0}', space=vmem, size = 0x1000, scoped, tag = 'output window, operand 0, single buffered']
    %7 = vsyncpa [#allocation3], 0
    %8 = vsyncpa [#allocation6], 0
    %9 = vsyncpa [#allocation4], 0
    // Predicated region
    $region2: #{tpu_custom_call.1} parent=1 // pred_check
      _
    $region3: #{tpu_custom_call.1} parent=1 // pred_check_branch
      %11 = sbr.rel (0) target = $region5
    $region4: #{tpu_custom_call.1} parent=1 // pred_region
      %s12 = sadd.s32 0, 0
      %s13 = smul.u32 2, %s12
      %s15 = ssub.s32 256, 256
      %16 = vsyncadd [#allocation3], %s15
      %s17 = smul.addr %s13, 128
      %s18 = scalar_lea.hbm %s0, %s17
      %s19 = sshll.u32 [#allocation2], 4
      %s20 = int_to_ptr.vmem [resolvable:$true] %s19
      %25 = dma.hbm_to_vmem [thread:$0]  %s18, 256, %s20, [#allocation3], 128, 128, 8
    $region5: #{tpu_custom_call.1} parent=1 // pred_fallthru
      _
    // Predicated region
    $region6: #{tpu_custom_call.1} parent=1 // pred_check
      _
    $region7: #{tpu_custom_call.1} parent=1 // pred_check_branch
      %27 = sbr.rel (0) target = $region9
    $region8: #{tpu_custom_call.1} parent=1 // pred_region
      %s28 = sadd.s32 0, 0
      %s29 = smul.u32 2, %s28
      %s31 = ssub.s32 256, 256
      %32 = vsyncadd [#allocation6], %s31
      %s33 = smul.addr %s29, 128
      %s34 = scalar_lea.hbm %s1, %s33
      %s35 = sshll.u32 [#allocation5], 4
      %s36 = int_to_ptr.vmem [resolvable:$true] %s35
      %41 = dma.hbm_to_vmem [thread:$0]  %s34, 256, %s36, [#allocation6], 128, 128, 8
    $region9: #{tpu_custom_call.1} parent=1 // pred_fallthru
      _
    // Predicated region
    $region10: #{tpu_custom_call.1} parent=1 // pred_check
      _
    $region11: #{tpu_custom_call.1} parent=1 // pred_check_branch
      %43 = sbr.rel (0) target = $region13
    $region12: #{tpu_custom_call.1} parent=1 // pred_region
      %44 = dma.done [#allocation3], 256
    $region13: #{tpu_custom_call.1} parent=1 // pred_fallthru
      _
    // Predicated region
    $region14: #{tpu_custom_call.1} parent=1 // pred_check
      _
    $region15: #{tpu_custom_call.1} parent=1 // pred_check_branch
      %46 = sbr.rel (0) target = $region17
    $region16: #{tpu_custom_call.1} parent=1 // pred_region
      %47 = dma.done [#allocation6], 256
    $region17: #{tpu_custom_call.1} parent=1 // pred_fallthru
      _
    %s48 = sadd.s32 0, 0
    %s49 = smul.u32 2, %s48
    %s50 = sadd.s32 0, 0
    %s51 = smul.u32 2, %s50
    %p52 = scmp.eq.s32.totalorder 0, 0
    // Predicated region
    $region18: #{tpu_custom_call.1} parent=1 // pred_check
      %p53 = pneg %p52
    $region19: #{tpu_custom_call.1} parent=1 // pred_check_branch
      %55 = sbr.rel (%p53) target = $region21
    $region20: #{tpu_custom_call.1} parent=1 // pred_region
      %56 = vst [vmem:[#allocation7] sm:$0xff] 0.0
    $region21: #{tpu_custom_call.1} parent=1 // pred_fallthru
      _
    %v57 = vld [vmem:[#allocation2] sm:$0xff]
    %v58 = vld [vmem:[#allocation2 + $0x8] sm:$0xff]
    %v59 = vld [vmem:[#allocation5] sm:$0xff]
    %v60 = vld [vmem:[#allocation5 + $0x8] sm:$0xff]
    %v61 = vsub.f32 %v57, %v59
    %v62 = vsub.f32 %v58, %v60
    %v63 = vmul.f32 %v61, %v61
    %v64 = vmul.f32 %v62, %v62
    %v65 = vadd.f32 %v63, %v64
    %v66 = vadd.f32 %v65, 0.0
    %v67 = vld [vmem:[#allocation7] sm:$0xff]
    %v68 = vadd.f32 %v67, %v66
    %69 = vst [vmem:[#allocation7] sm:$0xff] %v68
    // Predicated region
    $region22: #{tpu_custom_call.1} parent=1 // pred_check
      _
    $region23: #{tpu_custom_call.1} parent=1 // pred_check_branch
      %71 = sbr.rel (0) target = $region25
    $region24: #{tpu_custom_call.1} parent=1 // pred_region
      %s73 = ssub.s32 128, 128
      %74 = vsyncadd [#allocation4], %s73
      %s76 = sshll.u32 [#allocation7], 4
      %s77 = int_to_ptr.vmem [resolvable:$true] %s76
      %79 = dma.vmem_to_hbm [thread:$0]  %s77, 128, %s2, [#allocation4]
    $region25: #{tpu_custom_call.1} parent=1 // pred_fallthru
      _
    // Predicated region
    $region26: #{tpu_custom_call.1} parent=1 // pred_check
      _
    $region27: #{tpu_custom_call.1} parent=1 // pred_check_branch
      %81 = sbr.rel (0) target = $region29
    $region28: #{tpu_custom_call.1} parent=1 // pred_region
      %82 = dma.done [#allocation4], 128
    $region29: #{tpu_custom_call.1} parent=1 // pred_fallthru
      _
    %83 = vsyncpa [#allocation3], 1
    %84 = vsyncpa [#allocation6], 1
    %85 = vsyncpa [#allocation4], 1

</llo_original>
